<compile_context>
chip_gen: v7x
topology: tpu7x:2x2x1
jax: 0.10.0
libtpu: 0.0.40
codegen_flags: <defaults>
</compile_context>

<pallas_src>
import functools

import jax
import jax.numpy as jnp
from jax.experimental import pallas as pl
from jax.experimental.pallas import tpu as pltpu


# TODO(synk): `layers` is an externally-provided nn.ModuleList with unknown structure;
# the Encoder is instantiated with an empty layer stack, so only the final
# LayerNormalization is implemented as a kernel.


def _layernorm_kernel(alpha_ref, bias_ref, x_ref, o_ref, *, eps: float):
    # alpha_ref / bias_ref: (1,) f32 scalars in SMEM (scalar prefetch).
    # x_ref / o_ref: (tm, D) tiles in VMEM; compute is always f32.
    x = x_ref[...].astype(jnp.float32)
    d = x.shape[-1]                      # note: d == 1 divides by zero (matches torch.std)
    mean = jnp.mean(x, axis=-1, keepdims=True)
    xc = x - mean
    # torch.std defaults to the unbiased estimator (divide by N-1).
    var = jnp.sum(xc * xc, axis=-1, keepdims=True) * jnp.float32(1.0 / (d - 1))
    std = jnp.sqrt(var)
    # Exact reciprocal on the (tm, 1) per-row vector: negligible cost, exact numerics.
    inv = 1.0 / (std + jnp.float32(eps))
    scale = alpha_ref[0] * inv           # (tm, 1) per-row scale (alpha folded in)
    o_ref[...] = (xc * scale + bias_ref[0]).astype(o_ref.dtype)


def _plan(m: int, d: int, itemsize: int, tm_override: int | None):
    """Pick the row tile (dtype-aware alignment) and a footprint-derived VMEM limit."""
    align = max(8, 32 // itemsize)       # sublane multiple: 8 f32, 16 bf16, 32 int8/fp8

    if tm_override is not None:
        tm = tm_override
    elif m <= align:
        tm = m                           # full-extent block (allowed even if < align)
    else:
        # ~4 MiB of f32 working set per tile (=> 4 MiB HBM tile for f32, 2 MiB for bf16).
        target_f32_bytes = 4 * 1024 * 1024
        rows = max(align, (target_f32_bytes // (d * 4)) // align * align)
        # Keep >= ~4 grid steps when rows permit: megacore sharding + pipeline overlap.
        rows_for_steps = pl.cdiv(pl.cdiv(m, 4), align) * align
        rows = min(rows, max(align, rows_for_steps))
        tm = min(rows, pl.cdiv(m, align) * align)

    # Footprint: 2 double-buffered input tiles + 2 output tiles + ~3 full-tile f32
    # temporaries (upcast / centered / pre-cast result) + small margin.
    tile_bytes = tm * d * itemsize
    f32_bytes = tm * d * 4
    footprint = 4 * tile_bytes + 3 * f32_bytes + (2 << 20)
    # Clamp: at least the 32 MiB scoped default, never above 40 MiB (safe on v7x's
    # 64 MiB per-TC physical VMEM; trivially fine on v5e/v6e's 128 MiB).
    vmem_limit = min(max(footprint, 32 << 20), 40 << 20)
    return tm, vmem_limit


def encoder_forward(x, mask, alpha, bias, *, eps: float = 1e-6, tm: int | None = None):
    """Encoder with an empty layer stack: the final LayerNormalization.

    x:     [B, S, D] float32 or bfloat16
    mask:  unused (would be consumed by the injected encoder layers)
    alpha: [1] float32 scalar parameter
    bias:  [1] float32 scalar parameter
    """
    del mask  # only consumed by the (empty) layer stack
    b, s, d = x.shape
    m = b * s
    x2d = x.reshape(m, d)

    itemsize = jnp.dtype(x.dtype).itemsize
    tm, vmem_limit = _plan(m, d, itemsize, tm)

    grid = (pl.cdiv(m, tm),)  # boundary (partial) blocks handled by Pallas masking

    kernel = functools.partial(_layernorm_kernel, eps=eps)
    out2d = pl.pallas_call(
        kernel,
        out_shape=jax.ShapeDtypeStruct((m, d), x.dtype),
        grid_spec=pltpu.PrefetchScalarGridSpec(
            num_scalar_prefetch=2,  # alpha, bias -> SMEM, passed to kernel + index_maps
            grid=grid,
            in_specs=[
                pl.BlockSpec((tm, d), lambda i, alpha_ref, bias_ref: (i, 0)),
            ],
            out_specs=pl.BlockSpec((tm, d), lambda i, alpha_ref, bias_ref: (i, 0)),
        ),
        compiler_params=pltpu.CompilerParams(
            dimension_semantics=("parallel",),  # shards row-loop across TCs (v7x megacore)
            vmem_limit_bytes=vmem_limit,        # footprint-derived, capped at 40 MiB
        ),
        cost_estimate=pl.CostEstimate(
            flops=8 * m * d,
            transcendentals=m,                  # sqrt per row
            bytes_accessed=2 * m * d * itemsize,
        ),
    )(alpha, bias, x2d)

    return out2d.reshape(b, s, d)


def _reference(x, alpha, bias, eps=1e-6):
    xf = x.astype(jnp.float32)
    mean = jnp.mean(xf, axis=-1, keepdims=True)
    var = jnp.sum((xf - mean) ** 2, axis=-1, keepdims=True) / (xf.shape[-1] - 1)
    std = jnp.sqrt(var)
    return alpha[0] * (xf - mean) / (std + eps) + bias[0]


if __name__ == "__main__":
    key = jax.random.PRNGKey(0)
    k1, k2, k3 = jax.random.split(key, 3)

    # Deterministic parameter init matching LayerNormalization.__init__:
    alpha = jnp.ones((1,), dtype=jnp.float32)
    bias = jnp.zeros((1,), dtype=jnp.float32)

    # --- test 1: small, lane-dense hidden (D multiple of 128) ---
    B, S, D = 2, 8, 128
    x = jax.random.normal(k1, (B, S, D), dtype=jnp.float32)
    mask = jnp.ones((B, 1, 1, S), dtype=jnp.float32)  # unused by the empty layer stack

    out = encoder_forward(x, mask, alpha, bias)
    out = jax.block_until_ready(out)
    ref = _reference(x, alpha, bias)
    assert out.shape == (B, S, D)
    assert jnp.max(jnp.abs(out - ref)) < 1e-4, "mismatch vs reference (test 1)"

    # --- test 2: non-divisible row count + forced small tile -> multi-step grid with
    #             a partial boundary block (exercises cdiv/masked writeback path) ---
    B2, S2, D2 = 3, 50, 256
    x2 = jax.random.normal(k2, (B2, S2, D2), dtype=jnp.float32)
    out2 = encoder_forward(x2, None, alpha, bias, tm=64)   # 150 rows / 64-row tiles
    out2 = jax.block_until_ready(out2)
    ref2 = _reference(x2, alpha, bias)
    assert out2.shape == (B2, S2, D2)
    assert jnp.max(jnp.abs(out2 - ref2)) < 1e-4, "mismatch vs reference (test 2)"

    # --- test 3: bf16 I/O (halved HBM traffic), dtype-aware 16-row sublane alignment ---
    B3, S3, D3 = 2, 24, 256
    x3 = jax.random.normal(k3, (B3, S3, D3), dtype=jnp.float32).astype(jnp.bfloat16)
    out3 = encoder_forward(x3, None, alpha, bias)
    out3 = jax.block_until_ready(out3)
    assert out3.dtype == jnp.bfloat16 and out3.shape == (B3, S3, D3)
    ref3 = _reference(x3, alpha, bias)                      # f32 reference from bf16 input
    assert jnp.max(jnp.abs(out3.astype(jnp.float32) - ref3)) < 4e-2, \
        "mismatch vs reference (test 3, bf16)"

    print("KERNEL_OK")
</pallas_src>

<mosaic_0001>
module attributes {stable_mosaic.version = 11 : i64} {
  func.func @_layernorm_kernel(%arg0: i32, %arg1: memref<1xf32, #tpu.memory_space<smem>>, %arg2: memref<1xf32, #tpu.memory_space<smem>>, %arg3: memref<8x128xf32, #tpu.memory_space<vmem>>, %arg4: memref<8x128xf32, #tpu.memory_space<vmem>>) attributes {dimension_semantics = [#tpu.dimension_semantics<parallel>], iteration_bounds = array<i64: 2>, scalar_prefetch = 2 : i64, scratch_operands = 0 : i64, tpu.core_type = #tpu.core_type<tc>, window_params = [{transform_indices = @transform_0, window_bounds = array<i64: 8, 128>}, {transform_indices = @transform_1, window_bounds = array<i64: 8, 128>}]} {
    %c0 = arith.constant 0 : index
    %c0_0 = arith.constant 0 : index
    %0 = vector.load %arg3[%c0, %c0_0] : memref<8x128xf32, #tpu.memory_space<vmem>>, vector<8x128xf32>
    %cst = arith.constant dense<0.000000e+00> : vector<8xf32>
    %1 = vector.multi_reduction <add>, %0, %cst [1] : vector<8x128xf32> to vector<8xf32>
    %2 = vector.shape_cast %1 : vector<8xf32> to vector<8x1xf32>
    %cst_1 = arith.constant 1.280000e+02 : f32
    %3 = vector.broadcast %cst_1 : f32 to vector<8x1xf32>
    %4 = arith.divf %2, %3 : vector<8x1xf32>
    %5 = vector.broadcast %4 : vector<8x1xf32> to vector<8x128xf32>
    %6 = arith.subf %0, %5 : vector<8x128xf32>
    %7 = arith.mulf %6, %6 : vector<8x128xf32>
    %cst_2 = arith.constant dense<0.000000e+00> : vector<8xf32>
    %8 = vector.multi_reduction <add>, %7, %cst_2 [1] : vector<8x128xf32> to vector<8xf32>
    %9 = vector.shape_cast %8 : vector<8xf32> to vector<8x1xf32>
    %cst_3 = arith.constant 0.00787401571 : f32
    %10 = vector.broadcast %cst_3 : f32 to vector<8x1xf32>
    %11 = arith.mulf %9, %10 : vector<8x1xf32>
    %12 = math.sqrt %11 : vector<8x1xf32>
    %cst_4 = arith.constant 9.99999997E-7 : f32
    %13 = vector.broadcast %cst_4 : f32 to vector<8x1xf32>
    %14 = arith.addf %12, %13 : vector<8x1xf32>
    %cst_5 = arith.constant 1.000000e+00 : f32
    %15 = vector.broadcast %cst_5 : f32 to vector<8x1xf32>
    %16 = arith.divf %15, %14 : vector<8x1xf32>
    %c0_6 = arith.constant 0 : index
    %17 = memref.load %arg1[%c0_6] : memref<1xf32, #tpu.memory_space<smem>>
    %18 = vector.broadcast %17 : f32 to vector<8x1xf32>
    %19 = arith.mulf %18, %16 : vector<8x1xf32>
    %20 = vector.broadcast %19 : vector<8x1xf32> to vector<8x128xf32>
    %21 = arith.mulf %6, %20 : vector<8x128xf32>
    %c0_7 = arith.constant 0 : index
    %22 = memref.load %arg2[%c0_7] : memref<1xf32, #tpu.memory_space<smem>>
    %23 = vector.broadcast %22 : f32 to vector<8x128xf32>
    %24 = arith.addf %21, %23 : vector<8x128xf32>
    %c0_8 = arith.constant 0 : index
    %c0_9 = arith.constant 0 : index
    %25 = vector.load %arg4[%c0_8, %c0_9] : memref<8x128xf32, #tpu.memory_space<vmem>>, vector<8x128xf32>
    tpu.vector_store %arg4[%c0_8, %c0_9], %24 {strides = array<i32>} : memref<8x128xf32, #tpu.memory_space<vmem>>, vector<8x128xf32>,
    return
  }
  func.func @transform_0(%arg0: i32, %arg1: memref<1xf32, #tpu.memory_space<smem>>, %arg2: memref<1xf32, #tpu.memory_space<smem>>) -> (i32, i32) {
    %c0_i32 = arith.constant 0 : i32
    %c0_i32_0 = arith.constant 0 : i32
    return %arg0, %c0_i32 : i32, i32
  }
  func.func @transform_1(%arg0: i32, %arg1: memref<1xf32, #tpu.memory_space<smem>>, %arg2: memref<1xf32, #tpu.memory_space<smem>>) -> (i32, i32) {
    %c0_i32 = arith.constant 0 : i32
    %c0_i32_0 = arith.constant 0 : i32
    return %arg0, %c0_i32 : i32, i32
  }
}

</mosaic_0001>

<llo_original>
// kernel: tpu_custom_call.1
$region0: #{tpu_custom_call.1}
  #allocation0 [shape = 'u32[]', space=smem, size = 0x4, offset = 0x4, fixed_abs, tag = 'smem constant byte address 0x4 - core index']
  #allocation1 [shape = 'u32[144,128]{1,0:T(1,128)}', space=vmem, size = 0x12000, scoped, tag = 'internal scratch']
  #allocation2 [shape = 's32[1]{0}', space=sflag, size = 0x4, scoped, tag = 'scoped memory for tpu_custom_call.1']
  #allocation3 [shape = 'f32[1]{0:T(128)S(6)}', space=smem, size = 0x200, scoped, tag = 'prefetched SMEM operand 0']
  #allocation4 [shape = 'f32[1]{0:T(128)S(6)}', space=smem, size = 0x200, scoped, tag = 'prefetched SMEM operand 1']
  %s0 = inlined_call_operand.<no memory space> [shape: f32[1], index: 0, kind: input, shape index: {}]
  %s1 = inlined_call_operand.<no memory space> [shape: f32[1], index: 1, kind: input, shape index: {}]
  %s2 = inlined_call_operand.hbm [shape: f32[16,128], index: 2, kind: input, shape index: {}]
  %s3 = inlined_call_operand.hbm [shape: f32[16,128], index: 3, kind: output, shape index: {}]
  %s4 = sld [smem:[#allocation0]]
  $region41: #{tpu_custom_call.1} parent=0
    _
  %s6 = ssub.s32 1, %s4
  %s7 = scalar_select 0, %s6, %s4
  %8 = sst [smem:[#allocation3]] %s0
  %9 = sst [smem:[#allocation4]] %s1
  $region1: #{tpu_custom_call.1} parent=0
    #allocation5 [shape = 'u8[8192]{0}', space=vmem, size = 0x2000, scoped, tag = 'input window, operand 2']
    #allocation6 [shape = 's32[2]{0}', space=sflag, size = 0x8, scoped, tag = 'scoped memory for tpu_custom_call.1']
    #allocation7 [shape = 's32[2]{0}', space=sflag, size = 0x8, scoped, tag = 'scoped memory for tpu_custom_call.1']
    #allocation8 [shape = 'u8[8192]{0}', space=vmem, size = 0x2000, scoped, tag = 'output window, operand 0']
    %10 = vsyncpa [#allocation6], 0
    %s11 = scalar_lea.sflag [#allocation6], 1
    %12 = vsyncpa %s11, 0
    %13 = vsyncpa [#allocation7], 0
    %s14 = scalar_lea.sflag [#allocation7], 1
    %15 = vsyncpa %s14, 0
    loop: start=0, step=1, limit=4
    $region2: #{tpu_custom_call.1} parent=1 // loop_pre_header
      _
    $region3: #{tpu_custom_call.1} parent=1 // loop_header
      %s17 = sphi 0, %s21
      %p18 = scmp.ge.s32.totalorder %s17, 4
      %s27 = sphi 0, %s29
      %s30 = sphi 0, %s27
      %s31 = sphi 0, %s30
      %s47 = sphi 0, %s31
      %s53 = sphi 0, %s55
      %s56 = sphi 0, %s53
      %s57 = sphi 0, %s56
      %s73 = sphi 0, %s57
    $region4: #{tpu_custom_call.1} parent=1 // loop_header_branch
      %20 = sbr.rel (%p18) target = $region8
    $region5: #{tpu_custom_call.1} parent=1 // loop_body
      %s22 = ssub.s32 %s17, 1
      %s23 = ssub.s32 %s17, 2
      %s24 = sadd.s32 %s17, 1
      %s25 = ssub.s32 %s17, %s24
      %p26 = scmp.eq.s32.totalorder %s25, 0
      %s28 = sadd.s32 %s27, 1
      %s29 = scalar_select %p26, %s27, %s28
      %p32 = pneg %p26
      %p33 = scmp.eq.s32.totalorder %s17, 1
      %p34 = por %p32, %p33
      %p35 = scmp.ne.s32.totalorder %s27, %s30
      %p36 = scmp.eq.s32.totalorder %s17, 0
      %p37 = por %p35, %p36
      %p38 = scmp.ne.s32.totalorder %s27, %s30
      %p39 = scmp.eq.s32.totalorder %s22, 1
      %p40 = por %p38, %p39
      %p41 = scmp.ne.s32.totalorder %s30, %s31
      %p42 = scmp.eq.s32.totalorder %s22, 0
      %p43 = por %p41, %p42
      %p44 = scmp.ne.s32.totalorder %s30, %s31
      %p45 = scmp.eq.s32.totalorder %s23, 1
      %p46 = por %p44, %p45
      %p48 = scmp.ne.s32.totalorder %s31, %s47
      %p49 = scmp.eq.s32.totalorder %s23, 0
      %p50 = por %p48, %p49
      %s51 = ssub.s32 %s17, %s24
      %p52 = scmp.eq.s32.totalorder %s51, 0
      %s54 = sadd.s32 %s53, 1
      %s55 = scalar_select %p52, %s53, %s54
      %p58 = pneg %p52
      %p59 = scmp.eq.s32.totalorder %s17, 1
      %p60 = por %p58, %p59
      %p61 = scmp.ne.s32.totalorder %s53, %s56
      %p62 = scmp.eq.s32.totalorder %s17, 0
      %p63 = por %p61, %p62
      %p64 = scmp.ne.s32.totalorder %s53, %s56
      %p65 = scmp.eq.s32.totalorder %s22, 1
      %p66 = por %p64, %p65
      %p67 = scmp.ne.s32.totalorder %s56, %s57
      %p68 = scmp.eq.s32.totalorder %s22, 0
      %p69 = por %p67, %p68
      %p70 = scmp.ne.s32.totalorder %s56, %s57
      %p71 = scmp.eq.s32.totalorder %s23, 1
      %p72 = por %p70, %p71
      %p74 = scmp.ne.s32.totalorder %s57, %s73
      %p75 = scmp.eq.s32.totalorder %s23, 0
      %p76 = por %p74, %p75
      %p77 = scmp.le.s32.totalorder 1, %s17
      %p78 = scmp.lt.s32.totalorder %s17, 3
      %p79 = pnand %p77, %p78
      %p80 = pneg %p79
      // Predicated region
      $region9: #{tpu_custom_call.1} parent=5 // pred_check
        _
      $region10: #{tpu_custom_call.1} parent=5 // pred_check_branch
        %82 = sbr.rel (%p79) target = $region12
      $region11: #{tpu_custom_call.1} parent=5 // pred_region
        %s83 = ssub.s32 %s17, 1
      $region12: #{tpu_custom_call.1} parent=5 // pred_fallthru
        _
      %p84 = scmp.lt.s32.totalorder %s17, 2
      // Predicated region
      $region13: #{tpu_custom_call.1} parent=5 // pred_check
        %p85 = pneg %p84
      $region14: #{tpu_custom_call.1} parent=5 // pred_check_branch
        %87 = sbr.rel (%p85) target = $region16
      $region15: #{tpu_custom_call.1} parent=5 // pred_region
        // Predicated region
        $region17: #{tpu_custom_call.1} parent=15 // pred_check
          %p88 = pneg %p37
        $region18: #{tpu_custom_call.1} parent=15 // pred_check_branch
          %90 = sbr.rel (%p88) target = $region20
        $region19: #{tpu_custom_call.1} parent=15 // pred_region
          %s91 = sand.u32 %s27, 1
          %s92 = scalar_lea.sflag [#allocation6], %s91
          %s93 = sand.u32 %s27, 1
          %s94 = smul.addr %s93, 8
          %s95 = scalar_lea.vmem [#allocation5], %s94
          %s97 = ssub.s32 128, 128
          %98 = vsyncadd %s92, %s97
          %s99 = smul.addr %s17, 128
          %s100 = scalar_lea.hbm %s2, %s99
          %s102 = sshll.u32 %s95, 4
          %s103 = int_to_ptr.vmem [resolvable:$true] %s102
          %105 = dma.hbm_to_vmem [thread:$0]  %s100, 128, %s103, %s92
        $region20: #{tpu_custom_call.1} parent=15 // pred_fallthru
          _
      $region16: #{tpu_custom_call.1} parent=5 // pred_fallthru
        _
      %p106 = scmp.le.s32.totalorder 1, %s17
      %p107 = scmp.lt.s32.totalorder %s17, 3
      %p108 = pnand %p106, %p107
      %p109 = pneg %p108
      // Predicated region
      $region21: #{tpu_custom_call.1} parent=5 // pred_check
        _
      $region22: #{tpu_custom_call.1} parent=5 // pred_check_branch
        %111 = sbr.rel (%p108) target = $region24
      $region23: #{tpu_custom_call.1} parent=5 // pred_region
        %s112 = ssub.s32 %s17, 1
        %s113 = sand.u32 %s30, 1
        %s114 = scalar_lea.sflag [#allocation6], %s113
        %s115 = sand.u32 %s30, 1
        %s116 = smul.addr %s115, 8
        %s117 = scalar_lea.vmem [#allocation5], %s116
        // Predicated region
        $region25: #{tpu_custom_call.1} parent=23 // pred_check
          %p118 = pneg %p43
        $region26: #{tpu_custom_call.1} parent=23 // pred_check_branch
          %120 = sbr.rel (%p118) target = $region28
        $region27: #{tpu_custom_call.1} parent=23 // pred_region
          %121 = dma.done %s114, 128
        $region28: #{tpu_custom_call.1} parent=23 // pred_fallthru
          _
        %s122 = sand.u32 %s30, 1
        %s123 = scalar_lea.sflag [#allocation6], %s122
        %s124 = sand.u32 %s30, 1
        %s125 = smul.addr %s124, 8
        %s126 = scalar_lea.vmem [#allocation5], %s125
        %p127 = pneg %p43
        %p128 = pneg %p40
        %p129 = pneg %p69
        %p130 = pneg %p66
        %s131 = sand.u32 %s56, 1
        %s132 = scalar_lea.sflag [#allocation7], %s131
        %s133 = sand.u32 %s56, 1
        %s134 = smul.addr %s133, 8
        %s135 = scalar_lea.vmem [#allocation8], %s134
        %v136 = vld [vmem:[%s117] sm:$0xff]
        %137 = vadd.xlane.f32.xlu0 %v136
        %v138 = vpop.xlane.xlu0 %137
        %v139 = vrcp.pop 128.0
        %v140 = vmul.f32 %v138, %v139
        %v141 = vsub.f32 %v136, %v140
        %v142 = vmul.f32 %v141, %v141
        %143 = vadd.xlane.f32.xlu0 %v142
        %v144 = vpop.xlane.xlu0 %143
        %v145 = vmul.f32 %v144, 0.007874016
        %v146 = vrsqrt.pop %v145
        %v147 = vmul.f32 %v145, %v146
        %vm148 = vcmp.eq.f32.partialorder %v145, inf
        %v149 = vsel %vm148, %v145, %v147
        %vm150 = vcmp.eq.f32.partialorder %v145, 0.0
        %v151 = vand.u32 %v145, 2147483648
        %v152 = vsel %vm150, %v151, %v149
        %v153 = vadd.f32 %v152, 1e-06
        %v154 = vrcp.pop %v153
        %v155 = vmul.f32 1.0, %v154
        %s156 = sld [smem:[#allocation3]]
        %v157 = vstv %s156
        %v158 = vmul.f32 %v157, %v155
        %v159 = vmul.f32 %v141, %v158
        %s160 = sld [smem:[#allocation4]]
        %v161 = vstv %s160
        %v162 = vadd.f32 %v159, %v161
        %163 = vst [vmem:[%s135] sm:$0xff] %v162
        %s164 = sand.u32 %s56, 1
        %s165 = scalar_lea.sflag [#allocation7], %s164
        %s166 = sand.u32 %s56, 1
        %s167 = smul.addr %s166, 8
        %s168 = scalar_lea.vmem [#allocation8], %s167
        // Predicated region
        $region29: #{tpu_custom_call.1} parent=23 // pred_check
          %p169 = pneg %p66
        $region30: #{tpu_custom_call.1} parent=23 // pred_check_branch
          %171 = sbr.rel (%p169) target = $region32
        $region31: #{tpu_custom_call.1} parent=23 // pred_region
          %s173 = ssub.s32 128, 128
          %174 = vsyncadd %s165, %s173
          %s175 = smul.addr %s22, 128
          %s176 = scalar_lea.hbm %s3, %s175
          %s178 = sshll.u32 %s168, 4
          %s179 = int_to_ptr.vmem [resolvable:$true] %s178
          %181 = dma.vmem_to_hbm [thread:$0]  %s179, 128, %s176, %s165
        $region32: #{tpu_custom_call.1} parent=23 // pred_fallthru
          _
      $region24: #{tpu_custom_call.1} parent=5 // pred_fallthru
        _
      %p182 = scmp.le.s32.totalorder 2, %s17
      // Predicated region
      $region33: #{tpu_custom_call.1} parent=5 // pred_check
        %p183 = pneg %p182
      $region34: #{tpu_custom_call.1} parent=5 // pred_check_branch
        %185 = sbr.rel (%p183) target = $region36
      $region35: #{tpu_custom_call.1} parent=5 // pred_region
        %s186 = ssub.s32 %s17, 2
        // Predicated region
        $region37: #{tpu_custom_call.1} parent=35 // pred_check
          %p187 = pneg %p72
        $region38: #{tpu_custom_call.1} parent=35 // pred_check_branch
          %189 = sbr.rel (%p187) target = $region40
        $region39: #{tpu_custom_call.1} parent=35 // pred_region
          %s190 = sand.u32 %s57, 1
          %s191 = scalar_lea.sflag [#allocation7], %s190
          %s192 = sand.u32 %s57, 1
          %s193 = smul.addr %s192, 8
          %s194 = scalar_lea.vmem [#allocation8], %s193
          %195 = dma.done %s191, 128
        $region40: #{tpu_custom_call.1} parent=35 // pred_fallthru
          _
      $region36: #{tpu_custom_call.1} parent=5 // pred_fallthru
        _
    $region6: #{tpu_custom_call.1} parent=1 // loop_footer
      %s21 = sadd.s32 1, %s17
    $region7: #{tpu_custom_call.1} parent=1 // loop_footer_branch
      %16 = sbr.rel target = $region3
    $region8: #{tpu_custom_call.1} parent=1 // loop_exit
      _
    %196 = vsyncpa [#allocation6], 1
    %s197 = scalar_lea.sflag [#allocation6], 1
    %198 = vsyncpa %s197, 1
    %199 = vsyncpa [#allocation7], 1
    %s200 = scalar_lea.sflag [#allocation7], 1
    %201 = vsyncpa %s200, 1

</llo_original>
